<compile_context>
chip_gen: v7x
topology: tpu7x:2x2x1
jax: 0.10.0
libtpu: 0.0.40
codegen_flags: <defaults>
</compile_context>

<pallas_src>
import jax
import jax.numpy as jnp
from jax.experimental import pallas as pl
from jax.experimental.pallas import tpu as pltpu

TILE_B_MAX = 2048  # max batch tile (lane axis); multiple of 128


def _round_up(n, m):
    return ((n + m - 1) // m) * m


def _mlp_kernel(x_ref, w1_ref, b1_ref, w2_ref, b2_ref, w3_ref, b3_ref,
                w4_ref, b4_ref, o_ref):
    # x tile is (F_in, tile_b) f32 in VMEM; cast to bf16 in-kernel (VPU slot),
    # all matmuls bf16 -> f32 accumulation, bias add / ReLU in f32.
    x = x_ref[...].astype(jnp.bfloat16)                       # (F_in, tile_b)
    h = jnp.dot(w1_ref[...], x,
                preferred_element_type=jnp.float32) + b1_ref[...]
    h = jnp.maximum(h, 0.0)                                   # (32, tile_b)
    h = jnp.dot(w2_ref[...], h.astype(jnp.bfloat16),
                preferred_element_type=jnp.float32) + b2_ref[...]
    h = jnp.maximum(h, 0.0)                                   # (64, tile_b)
    h = jnp.dot(w3_ref[...], h.astype(jnp.bfloat16),
                preferred_element_type=jnp.float32) + b3_ref[...]
    h = jnp.maximum(h, 0.0)                                   # (32, tile_b)
    h = jnp.dot(w4_ref[...], h.astype(jnp.bfloat16),
                preferred_element_type=jnp.float32) + b4_ref[...]
    o_ref[...] = h                                            # (out_pad, tile_b) f32


def _choose_batch_tiling(B):
    """Return (tile_b, n_tiles)."""
    if B <= 256:
        # Single full-extent tile: no padding, no 128-divisibility constraint.
        return B, 1
    # >= 2 grid steps (v7x has 2 TensorCores), tiles 128-aligned, <= TILE_B_MAX.
    n_tiles = max(2, pl.cdiv(B, TILE_B_MAX))
    tile_b = _round_up(pl.cdiv(B, n_tiles), 128)
    n_tiles = pl.cdiv(B, tile_b)
    return tile_b, n_tiles


def global_network_forward(x, params, out_dim):
    """x: (B, F_in) float32. Returns (B, out_dim) float32."""
    B, F_in = x.shape
    tile_b, n_tiles = _choose_batch_tiling(B)
    b_pad = tile_b * n_tiles

    # Feature-major layout: batch on the lane axis.  Only an F_in-wide pass.
    x_t = jnp.transpose(x)                                    # (F_in, B) f32
    if b_pad != B:
        x_t = jnp.pad(x_t, ((0, 0), (0, b_pad - B)))

    out_rows = params["w4"].shape[0]                          # round_up(out_dim, 8)
    resident = lambda a: pl.BlockSpec(a.shape, lambda i: (0, 0))

    out_t = pl.pallas_call(
        _mlp_kernel,
        out_shape=jax.ShapeDtypeStruct((out_rows, b_pad), jnp.float32),
        grid=(n_tiles,),
        in_specs=[
            pl.BlockSpec((F_in, tile_b), lambda i: (0, i)),   # x_T batch tile
            resident(params["w1"]), resident(params["b1"]),
            resident(params["w2"]), resident(params["b2"]),
            resident(params["w3"]), resident(params["b3"]),
            resident(params["w4"]), resident(params["b4"]),
        ],
        out_specs=pl.BlockSpec((out_rows, tile_b), lambda i: (0, i)),
        compiler_params=pltpu.CompilerParams(
            dimension_semantics=("parallel",)),
    )(x_t, params["w1"], params["b1"], params["w2"], params["b2"],
      params["w3"], params["b3"], params["w4"], params["b4"])

    # Compact result back to the module's (B, out_dim) layout.
    return jnp.transpose(out_t[:out_dim, :B])


def init_params(key, inputs_shape, outputs_shape):
    """nn.Linear-style init (uniform +-1/sqrt(fan_in)); linear4 weight *0.1,
    bias zeroed.  Weights kept in PyTorch (fan_out, fan_in) orientation for
    the feature-major kernel, cast to bf16; biases are (fan_out, 1) f32.
    Only layer 4 rows are zero-padded up to a multiple of 8."""
    dims = [(inputs_shape, 32), (32, 64), (64, 32), (32, outputs_shape)]
    out_pad = _round_up(outputs_shape, 8)
    params = {}
    for idx, (fan_in, fan_out) in enumerate(dims, start=1):
        key, kw, kb = jax.random.split(key, 3)
        bound = 1.0 / float(fan_in) ** 0.5
        w = jax.random.uniform(kw, (fan_out, fan_in), jnp.float32, -bound, bound)
        b = jax.random.uniform(kb, (fan_out, 1), jnp.float32, -bound, bound)
        if idx == 4:
            w = w * 0.1
            b = b * 0.0
            w = jnp.pad(w, ((0, out_pad - fan_out), (0, 0)))
            b = jnp.pad(b, ((0, out_pad - fan_out), (0, 0)))
        params[f"w{idx}"] = w.astype(jnp.bfloat16)
        params[f"b{idx}"] = b                                  # f32
    return params


def reference_forward(x, params, out_dim):
    """Pure-JAX reference on the same precision path (bf16 matmul inputs,
    f32 accumulation), standard batch-major orientation."""
    def lin(h, w, b):
        return jnp.dot(h.astype(jnp.bfloat16), jnp.transpose(w),
                       preferred_element_type=jnp.float32) + b[:, 0]
    h = jnp.maximum(lin(x, params["w1"], params["b1"]), 0.0)
    h = jnp.maximum(lin(h, params["w2"], params["b2"]), 0.0)
    h = jnp.maximum(lin(h, params["w3"], params["b3"]), 0.0)
    h = lin(h, params["w4"], params["b4"])
    return h[:, :out_dim]


if __name__ == "__main__":
    key = jax.random.PRNGKey(0)
    inputs_shape, outputs_shape = 16, 8
    batch = 8

    key, kx = jax.random.split(key)
    x = jax.random.normal(kx, (batch, inputs_shape), jnp.float32)
    params = init_params(key, inputs_shape, outputs_shape)

    out = jax.block_until_ready(global_network_forward(x, params, outputs_shape))

    ref = reference_forward(x, params, outputs_shape)
    assert out.shape == (batch, outputs_shape)
    assert jnp.allclose(out, ref, atol=2e-3, rtol=2e-3), "mismatch vs reference"

    print("KERNEL_OK")
</pallas_src>

<mosaic_0001>
module attributes {stable_mosaic.version = 11 : i64} {
  func.func @_mlp_kernel(%arg0: i32, %arg1: memref<16x8xf32, #tpu.memory_space<vmem>>, %arg2: memref<32x16xbf16, #tpu.memory_space<vmem>>, %arg3: memref<32x1xf32, #tpu.memory_space<vmem>>, %arg4: memref<64x32xbf16, #tpu.memory_space<vmem>>, %arg5: memref<64x1xf32, #tpu.memory_space<vmem>>, %arg6: memref<32x64xbf16, #tpu.memory_space<vmem>>, %arg7: memref<32x1xf32, #tpu.memory_space<vmem>>, %arg8: memref<8x32xbf16, #tpu.memory_space<vmem>>, %arg9: memref<8x1xf32, #tpu.memory_space<vmem>>, %arg10: memref<8x8xf32, #tpu.memory_space<vmem>>) attributes {dimension_semantics = [#tpu.dimension_semantics<parallel>], iteration_bounds = array<i64: 1>, scalar_prefetch = 0 : i64, scratch_operands = 0 : i64, tpu.core_type = #tpu.core_type<tc>, window_params = [{transform_indices = @transform_0, window_bounds = array<i64: 16, 8>}, {pipeline_mode = #tpu.pipeline_mode<synchronous>, transform_indices = @transform_1, window_bounds = array<i64: 32, 16>}, {pipeline_mode = #tpu.pipeline_mode<synchronous>, transform_indices = @transform_2, window_bounds = array<i64: 32, 1>}, {pipeline_mode = #tpu.pipeline_mode<synchronous>, transform_indices = @transform_3, window_bounds = array<i64: 64, 32>}, {pipeline_mode = #tpu.pipeline_mode<synchronous>, transform_indices = @transform_4, window_bounds = array<i64: 64, 1>}, {pipeline_mode = #tpu.pipeline_mode<synchronous>, transform_indices = @transform_5, window_bounds = array<i64: 32, 64>}, {pipeline_mode = #tpu.pipeline_mode<synchronous>, transform_indices = @transform_6, window_bounds = array<i64: 32, 1>}, {pipeline_mode = #tpu.pipeline_mode<synchronous>, transform_indices = @transform_7, window_bounds = array<i64: 8, 32>}, {pipeline_mode = #tpu.pipeline_mode<synchronous>, transform_indices = @transform_8, window_bounds = array<i64: 8, 1>}, {transform_indices = @transform_9, window_bounds = array<i64: 8, 8>}]} {
    %c0 = arith.constant 0 : index
    %c0_0 = arith.constant 0 : index
    %0 = vector.load %arg1[%c0, %c0_0] : memref<16x8xf32, #tpu.memory_space<vmem>>, vector<16x8xf32>
    %1 = arith.truncf %0 : vector<16x8xf32> to vector<16x8xbf16>
    %c0_1 = arith.constant 0 : index
    %c0_2 = arith.constant 0 : index
    %2 = vector.load %arg2[%c0_1, %c0_2] : memref<32x16xbf16, #tpu.memory_space<vmem>>, vector<32x16xbf16>
    %cst = arith.constant dense<0.000000e+00> : vector<32x8xf32>
    %3 = tpu.matmul %2, %1, %cst {dimension_numbers = #tpu.dot_dimension_numbers<[1], [0], [0], [1], [0, 0, 1, 1], [], []>} : vector<32x16xbf16>, vector<16x8xbf16>, vector<32x8xf32> -> vector<32x8xf32>
    %c0_3 = arith.constant 0 : index
    %c0_4 = arith.constant 0 : index
    %4 = vector.load %arg3[%c0_3, %c0_4] : memref<32x1xf32, #tpu.memory_space<vmem>>, vector<32x1xf32>
    %5 = vector.broadcast %4 : vector<32x1xf32> to vector<32x8xf32>
    %6 = arith.addf %3, %5 : vector<32x8xf32>
    %cst_5 = arith.constant 0.000000e+00 : f32
    %7 = vector.broadcast %cst_5 : f32 to vector<32x8xf32>
    %8 = arith.maximumf %6, %7 : vector<32x8xf32>
    %c0_6 = arith.constant 0 : index
    %c0_7 = arith.constant 0 : index
    %9 = vector.load %arg4[%c0_6, %c0_7] : memref<64x32xbf16, #tpu.memory_space<vmem>>, vector<64x32xbf16>
    %10 = arith.truncf %8 : vector<32x8xf32> to vector<32x8xbf16>
    %cst_8 = arith.constant dense<0.000000e+00> : vector<64x8xf32>
    %11 = tpu.matmul %9, %10, %cst_8 {dimension_numbers = #tpu.dot_dimension_numbers<[1], [0], [0], [1], [0, 0, 1, 1], [], []>} : vector<64x32xbf16>, vector<32x8xbf16>, vector<64x8xf32> -> vector<64x8xf32>
    %c0_9 = arith.constant 0 : index
    %c0_10 = arith.constant 0 : index
    %12 = vector.load %arg5[%c0_9, %c0_10] : memref<64x1xf32, #tpu.memory_space<vmem>>, vector<64x1xf32>
    %13 = vector.broadcast %12 : vector<64x1xf32> to vector<64x8xf32>
    %14 = arith.addf %11, %13 : vector<64x8xf32>
    %cst_11 = arith.constant 0.000000e+00 : f32
    %15 = vector.broadcast %cst_11 : f32 to vector<64x8xf32>
    %16 = arith.maximumf %14, %15 : vector<64x8xf32>
    %c0_12 = arith.constant 0 : index
    %c0_13 = arith.constant 0 : index
    %17 = vector.load %arg6[%c0_12, %c0_13] : memref<32x64xbf16, #tpu.memory_space<vmem>>, vector<32x64xbf16>
    %18 = arith.truncf %16 : vector<64x8xf32> to vector<64x8xbf16>
    %cst_14 = arith.constant dense<0.000000e+00> : vector<32x8xf32>
    %19 = tpu.matmul %17, %18, %cst_14 {dimension_numbers = #tpu.dot_dimension_numbers<[1], [0], [0], [1], [0, 0, 1, 1], [], []>} : vector<32x64xbf16>, vector<64x8xbf16>, vector<32x8xf32> -> vector<32x8xf32>
    %c0_15 = arith.constant 0 : index
    %c0_16 = arith.constant 0 : index
    %20 = vector.load %arg7[%c0_15, %c0_16] : memref<32x1xf32, #tpu.memory_space<vmem>>, vector<32x1xf32>
    %21 = vector.broadcast %20 : vector<32x1xf32> to vector<32x8xf32>
    %22 = arith.addf %19, %21 : vector<32x8xf32>
    %cst_17 = arith.constant 0.000000e+00 : f32
    %23 = vector.broadcast %cst_17 : f32 to vector<32x8xf32>
    %24 = arith.maximumf %22, %23 : vector<32x8xf32>
    %c0_18 = arith.constant 0 : index
    %c0_19 = arith.constant 0 : index
    %25 = vector.load %arg8[%c0_18, %c0_19] : memref<8x32xbf16, #tpu.memory_space<vmem>>, vector<8x32xbf16>
    %26 = arith.truncf %24 : vector<32x8xf32> to vector<32x8xbf16>
    %cst_20 = arith.constant dense<0.000000e+00> : vector<8x8xf32>
    %27 = tpu.matmul %25, %26, %cst_20 {dimension_numbers = #tpu.dot_dimension_numbers<[1], [0], [0], [1], [0, 0, 1, 1], [], []>} : vector<8x32xbf16>, vector<32x8xbf16>, vector<8x8xf32> -> vector<8x8xf32>
    %c0_21 = arith.constant 0 : index
    %c0_22 = arith.constant 0 : index
    %28 = vector.load %arg9[%c0_21, %c0_22] : memref<8x1xf32, #tpu.memory_space<vmem>>, vector<8x1xf32>
    %29 = vector.broadcast %28 : vector<8x1xf32> to vector<8x8xf32>
    %30 = arith.addf %27, %29 : vector<8x8xf32>
    %c0_23 = arith.constant 0 : index
    %c0_24 = arith.constant 0 : index
    %31 = vector.load %arg10[%c0_23, %c0_24] : memref<8x8xf32, #tpu.memory_space<vmem>>, vector<8x8xf32>
    tpu.vector_store %arg10[%c0_23, %c0_24], %30 {strides = array<i32>} : memref<8x8xf32, #tpu.memory_space<vmem>>, vector<8x8xf32>,
    return
  }
  func.func @transform_0(%arg0: i32) -> (i32, i32) {
    %c0_i32 = arith.constant 0 : i32
    %c0_i32_0 = arith.constant 0 : i32
    return %c0_i32, %arg0 : i32, i32
  }
  func.func @transform_1(%arg0: i32) -> (i32, i32) {
    %c0_i32 = arith.constant 0 : i32
    %c0_i32_0 = arith.constant 0 : i32
    %c0_i32_1 = arith.constant 0 : i32
    return %c0_i32, %c0_i32_0 : i32, i32
  }
  func.func @transform_2(%arg0: i32) -> (i32, i32) {
    %c0_i32 = arith.constant 0 : i32
    %c0_i32_0 = arith.constant 0 : i32
    %c0_i32_1 = arith.constant 0 : i32
    return %c0_i32, %c0_i32_0 : i32, i32
  }
  func.func @transform_3(%arg0: i32) -> (i32, i32) {
    %c0_i32 = arith.constant 0 : i32
    %c0_i32_0 = arith.constant 0 : i32
    %c0_i32_1 = arith.constant 0 : i32
    return %c0_i32, %c0_i32_0 : i32, i32
  }
  func.func @transform_4(%arg0: i32) -> (i32, i32) {
    %c0_i32 = arith.constant 0 : i32
    %c0_i32_0 = arith.constant 0 : i32
    %c0_i32_1 = arith.constant 0 : i32
    return %c0_i32, %c0_i32_0 : i32, i32
  }
  func.func @transform_5(%arg0: i32) -> (i32, i32) {
    %c0_i32 = arith.constant 0 : i32
    %c0_i32_0 = arith.constant 0 : i32
    %c0_i32_1 = arith.constant 0 : i32
    return %c0_i32, %c0_i32_0 : i32, i32
  }
  func.func @transform_6(%arg0: i32) -> (i32, i32) {
    %c0_i32 = arith.constant 0 : i32
    %c0_i32_0 = arith.constant 0 : i32
    %c0_i32_1 = arith.constant 0 : i32
    return %c0_i32, %c0_i32_0 : i32, i32
  }
  func.func @transform_7(%arg0: i32) -> (i32, i32) {
    %c0_i32 = arith.constant 0 : i32
    %c0_i32_0 = arith.constant 0 : i32
    %c0_i32_1 = arith.constant 0 : i32
    return %c0_i32, %c0_i32_0 : i32, i32
  }
  func.func @transform_8(%arg0: i32) -> (i32, i32) {
    %c0_i32 = arith.constant 0 : i32
    %c0_i32_0 = arith.constant 0 : i32
    %c0_i32_1 = arith.constant 0 : i32
    return %c0_i32, %c0_i32_0 : i32, i32
  }
  func.func @transform_9(%arg0: i32) -> (i32, i32) {
    %c0_i32 = arith.constant 0 : i32
    %c0_i32_0 = arith.constant 0 : i32
    return %c0_i32, %arg0 : i32, i32
  }
}

</mosaic_0001>

<llo_original>
// kernel: tpu_custom_call.1
$region0: #{tpu_custom_call.1}
  #allocation0 [shape = 'u32[]', space=smem, size = 0x4, offset = 0x4, fixed_abs, tag = 'smem constant byte address 0x4 - core index']
  #allocation1 [shape = 'u32[144,128]{1,0:T(1,128)}', space=vmem, size = 0x12000, scoped, tag = 'internal scratch']
  %s0 = inlined_call_operand.vmem [shape: f32[16,8], index: 0, kind: input, shape index: {}]
  %s1 = inlined_call_operand.vmem [shape: bf16[32,16], index: 1, kind: input, shape index: {}]
  %s2 = inlined_call_operand.vmem [shape: f32[32,1], index: 2, kind: input, shape index: {}]
  %s3 = inlined_call_operand.vmem [shape: bf16[64,32], index: 3, kind: input, shape index: {}]
  %s4 = inlined_call_operand.vmem [shape: f32[64,1], index: 4, kind: input, shape index: {}]
  %s5 = inlined_call_operand.vmem [shape: bf16[32,64], index: 5, kind: input, shape index: {}]
  %s6 = inlined_call_operand.vmem [shape: f32[32,1], index: 6, kind: input, shape index: {}]
  %s7 = inlined_call_operand.vmem [shape: bf16[8,32], index: 7, kind: input, shape index: {}]
  %s8 = inlined_call_operand.vmem [shape: f32[8,1], index: 8, kind: input, shape index: {}]
  %s9 = inlined_call_operand.hbm [shape: f32[8,8], index: 9, kind: output, shape index: {}]
  %s10 = sld [smem:[#allocation0]]
  $region46: #{tpu_custom_call.1} parent=0
    _
  %s12 = ssub.s32 1, %s10
  %s13 = scalar_select 0, %s12, %s10
  $region1: #{tpu_custom_call.1} parent=0
    #allocation2 [shape = 'u8[4096]{0}', space=vmem, size = 0x1000, scoped, tag = 'output window, operand 0, single buffered']
    #allocation3 [shape = 's32[1]{0}', space=sflag, size = 0x4, scoped, tag = 'scoped memory for tpu_custom_call.1']
    %14 = vsyncpa [#allocation3], 0
    // Predicated region
    $region2: #{tpu_custom_call.1} parent=1 // pred_check
      _
    $region3: #{tpu_custom_call.1} parent=1 // pred_check_branch
      %16 = sbr.rel (0) target = $region5
    $region4: #{tpu_custom_call.1} parent=1 // pred_region
      _
    $region5: #{tpu_custom_call.1} parent=1 // pred_fallthru
      _
    // Predicated region
    $region6: #{tpu_custom_call.1} parent=1 // pred_check
      _
    $region7: #{tpu_custom_call.1} parent=1 // pred_check_branch
      %18 = sbr.rel (0) target = $region9
    $region8: #{tpu_custom_call.1} parent=1 // pred_region
      _
    $region9: #{tpu_custom_call.1} parent=1 // pred_fallthru
      _
    // Predicated region
    $region10: #{tpu_custom_call.1} parent=1 // pred_check
      _
    $region11: #{tpu_custom_call.1} parent=1 // pred_check_branch
      %20 = sbr.rel (0) target = $region13
    $region12: #{tpu_custom_call.1} parent=1 // pred_region
      _
    $region13: #{tpu_custom_call.1} parent=1 // pred_fallthru
      _
    // Predicated region
    $region14: #{tpu_custom_call.1} parent=1 // pred_check
      _
    $region15: #{tpu_custom_call.1} parent=1 // pred_check_branch
      %22 = sbr.rel (0) target = $region17
    $region16: #{tpu_custom_call.1} parent=1 // pred_region
      _
    $region17: #{tpu_custom_call.1} parent=1 // pred_fallthru
      _
    // Predicated region
    $region18: #{tpu_custom_call.1} parent=1 // pred_check
      _
    $region19: #{tpu_custom_call.1} parent=1 // pred_check_branch
      %24 = sbr.rel (0) target = $region21
    $region20: #{tpu_custom_call.1} parent=1 // pred_region
      _
    $region21: #{tpu_custom_call.1} parent=1 // pred_fallthru
      _
    // Predicated region
    $region22: #{tpu_custom_call.1} parent=1 // pred_check
      _
    $region23: #{tpu_custom_call.1} parent=1 // pred_check_branch
      %26 = sbr.rel (0) target = $region25
    $region24: #{tpu_custom_call.1} parent=1 // pred_region
      _
    $region25: #{tpu_custom_call.1} parent=1 // pred_fallthru
      _
    // Predicated region
    $region26: #{tpu_custom_call.1} parent=1 // pred_check
      _
    $region27: #{tpu_custom_call.1} parent=1 // pred_check_branch
      %28 = sbr.rel (0) target = $region29
    $region28: #{tpu_custom_call.1} parent=1 // pred_region
      _
    $region29: #{tpu_custom_call.1} parent=1 // pred_fallthru
      _
    // Predicated region
    $region30: #{tpu_custom_call.1} parent=1 // pred_check
      _
    $region31: #{tpu_custom_call.1} parent=1 // pred_check_branch
      %30 = sbr.rel (0) target = $region33
    $region32: #{tpu_custom_call.1} parent=1 // pred_region
      _
    $region33: #{tpu_custom_call.1} parent=1 // pred_fallthru
      _
    // Predicated region
    $region34: #{tpu_custom_call.1} parent=1 // pred_check
      _
    $region35: #{tpu_custom_call.1} parent=1 // pred_check_branch
      %32 = sbr.rel (0) target = $region37
    $region36: #{tpu_custom_call.1} parent=1 // pred_region
      _
    $region37: #{tpu_custom_call.1} parent=1 // pred_fallthru
      _
    %v34 = vld [vmem:[%s0] sm:$0xff]
    %v35 = vld [vmem:[%s0 + $0x8] sm:$0xff]
    %v36 = vpack.c.bf16 %v35, %v34
    %v37 = vld [vmem:[%s1] sm:$0xf]
    %v38 = vld [vmem:[%s1 + $0x4] sm:$0xf]
    %v39 = vld [vmem:[%s1 + $0x8] sm:$0xf]
    %v40 = vld [vmem:[%s1 + $0xc] sm:$0xf]
    %v41 = vld [vmem:[%s2] sm:$0xff]
    %v42 = vld [vmem:[%s2 + $0x8] sm:$0xff]
    %v43 = vld [vmem:[%s2 + $0x10] sm:$0xff]
    %v44 = vld [vmem:[%s2 + $0x18] sm:$0xff]
    %46 = vset.pattern.permute.xlu0 0
    %47 = vperm.xlu0 %46, %v41
    %v48 = vpop.permute.xlu0 %47
    %51 = vset.pattern.permute.xlu0 0
    %52 = vperm.xlu0 %51, %v42
    %v53 = vpop.permute.xlu0 %52
    %56 = vset.pattern.permute.xlu0 0
    %57 = vperm.xlu0 %56, %v43
    %v58 = vpop.permute.xlu0 %57
    %61 = vset.pattern.permute.xlu0 0
    %62 = vperm.xlu0 %61, %v44
    %v63 = vpop.permute.xlu0 %62
    %v69 = vunpack.c.l.b16 %v37
    %v70 = vunpack.c.l.b16 %v38
    %v71 = vunpack.c.l.b16 %v39
    %v72 = vunpack.c.l.b16 %v40
    %v73 = vpack.c.b16 %v70, %v69
    %v74 = vpack.c.b16 %v72, %v71
    %vm75 = vcmask 130048
    %v77 = vsel %vm75, %v73, 0
    %v80 = vsel %vm75, %v74, 0
    %82 = vmatprep.subr.bf16.mxu0 0
    %83 = vmatpush1.bf16.msra.mxu0 %v36
    %84 = vmatprep.subr.bf16.mxu0 0
    %85 = vmatpush1.bf16.msra.mxu0 0
    %86 = vmatprep.subr.bf16.mxu0 0
    %87 = vmatpush1.bf16.msra.mxu0 0
    %88 = vmatprep.subr.bf16.mxu0 0
    %89 = vmatpush1.bf16.msra.mxu0 0
    %90 = vmatprep.subr.bf16.mxu0 0
    %91 = vmatpush1.bf16.msra.mxu0 0
    %92 = vmatprep.subr.bf16.mxu0 0
    %93 = vmatpush1.bf16.msra.mxu0 0
    %94 = vmatprep.subr.bf16.mxu0 0
    %95 = vmatpush1.bf16.msra.mxu0 0
    %96 = vmatprep.subr.bf16.mxu0 0
    %97 = vmatpush1.bf16.msra.mxu0 0
    %98 = vmatprep.subr.bf16.mxu0 0
    %99 = vmatpush1.bf16.msra.mxu0 0
    %100 = vmatprep.subr.bf16.mxu0 0
    %101 = vmatpush1.bf16.msra.mxu0 0
    %102 = vmatprep.subr.bf16.mxu0 0
    %103 = vmatpush1.bf16.msra.mxu0 0
    %104 = vmatprep.subr.bf16.mxu0 0
    %105 = vmatpush1.bf16.msra.mxu0 0
    %106 = vmatprep.subr.bf16.mxu0 0
    %107 = vmatpush1.bf16.msra.mxu0 0
    %108 = vmatprep.subr.bf16.mxu0 0
    %109 = vmatpush1.bf16.msra.mxu0 0
    %110 = vmatprep.subr.bf16.mxu0 0
    %111 = vmatpush1.bf16.msra.mxu0 0
    %112 = vmatprep.subr.bf16.mxu0 0
    %113 = vmatpush1.bf16.msra.mxu0 0
    %114 = vmatprep.mubr.bf16.mxu0 0
    %115 = vmatmul.mubr.bf16.gmra.mrb[0].mxu0 %v77
    %v116 = vpop.f32.mrb[0].mxu0
    %v117 = vadd.f32 %v48, %v116
    %v118 = vpop.f32.mrb[0].mxu0
    %v119 = vpop.f32.mrb[0].mxu0
    %v120 = vadd.f32 %v53, %v119
    %v121 = vpop.f32.mrb[0].mxu0
    %122 = vmatprep.mubr.bf16.mxu0 0
    %123 = vmatmul.mubr.bf16.gmra.mrb[0].mxu0 %v80
    %v124 = vpop.f32.mrb[0].mxu0
    %v125 = vadd.f32 %v58, %v124
    %v126 = vpop.f32.mrb[0].mxu0
    %v127 = vpop.f32.mrb[0].mxu0
    %v128 = vadd.f32 %v63, %v127
    %v129 = vpop.f32.mrb[0].mxu0
    %130 = vdwg.mxu0
    %v131 = vmax.f32 %v117, 0.0
    %v132 = vmax.f32 %v120, 0.0
    %v133 = vmax.f32 %v125, 0.0
    %v134 = vmax.f32 %v128, 0.0
    %v135 = vld [vmem:[%s3] sm:$0xf]
    %v136 = vld [vmem:[%s3 + $0x4] sm:$0xf]
    %v137 = vld [vmem:[%s3 + $0x8] sm:$0xf]
    %v138 = vld [vmem:[%s3 + $0xc] sm:$0xf]
    %v139 = vld [vmem:[%s3 + $0x10] sm:$0xf]
    %v140 = vld [vmem:[%s3 + $0x14] sm:$0xf]
    %v141 = vld [vmem:[%s3 + $0x18] sm:$0xf]
    %v142 = vld [vmem:[%s3 + $0x1c] sm:$0xf]
    %v143 = vpack.c.bf16 %v132, %v131
    %v144 = vpack.c.bf16 %v134, %v133
    %v145 = vld [vmem:[%s4] sm:$0xff]
    %v146 = vld [vmem:[%s4 + $0x8] sm:$0xff]
    %v147 = vld [vmem:[%s4 + $0x10] sm:$0xff]
    %v148 = vld [vmem:[%s4 + $0x18] sm:$0xff]
    %v149 = vld [vmem:[%s4 + $0x20] sm:$0xff]
    %v150 = vld [vmem:[%s4 + $0x28] sm:$0xff]
    %v151 = vld [vmem:[%s4 + $0x30] sm:$0xff]
    %v152 = vld [vmem:[%s4 + $0x38] sm:$0xff]
    %154 = vset.pattern.permute.xlu0 0
    %155 = vperm.xlu0 %154, %v145
    %v156 = vpop.permute.xlu0 %155
    %159 = vset.pattern.permute.xlu0 0
    %160 = vperm.xlu0 %159, %v146
    %v161 = vpop.permute.xlu0 %160
    %164 = vset.pattern.permute.xlu0 0
    %165 = vperm.xlu0 %164, %v147
    %v166 = vpop.permute.xlu0 %165
    %169 = vset.pattern.permute.xlu0 0
    %170 = vperm.xlu0 %169, %v148
    %v171 = vpop.permute.xlu0 %170
    %174 = vset.pattern.permute.xlu0 0
    %175 = vperm.xlu0 %174, %v149
    %v176 = vpop.permute.xlu0 %175
    %179 = vset.pattern.permute.xlu0 0
    %180 = vperm.xlu0 %179, %v150
    %v181 = vpop.permute.xlu0 %180
    %184 = vset.pattern.permute.xlu0 0
    %185 = vperm.xlu0 %184, %v151
    %v186 = vpop.permute.xlu0 %185
    %189 = vset.pattern.permute.xlu0 0
    %190 = vperm.xlu0 %189, %v152
    %v191 = vpop.permute.xlu0 %190
    %v201 = vunpack.c.l.b16 %v135
    %v202 = vunpack.c.l.b16 %v136
    %v203 = vunpack.c.l.b16 %v137
    %v204 = vunpack.c.l.b16 %v138
    %v205 = vunpack.c.l.b16 %v139
    %v206 = vunpack.c.l.b16 %v140
    %v207 = vunpack.c.l.b16 %v141
    %v208 = vunpack.c.l.b16 %v142
    %v209 = vpack.c.b16 %v202, %v201
    %v210 = vpack.c.b16 %v204, %v203
    %v211 = vpack.c.b16 %v206, %v205
    %v212 = vpack.c.b16 %v208, %v207
    %vm213 = vcmask 261120
    %v215 = vsel %vm213, %v209, 0
    %v218 = vsel %vm213, %v210, 0
    %v221 = vsel %vm213, %v211, 0
    %v224 = vsel %vm213, %v212, 0
    %226 = vmatprep.subr.bf16.mxu0 0
    %227 = vmatpush1.bf16.msra.mxu0 %v143
    %228 = vmatprep.subr.bf16.mxu0 0
    %229 = vmatpush1.bf16.msra.mxu0 %v144
    %230 = vmatprep.subr.bf16.mxu0 0
    %231 = vmatpush1.bf16.msra.mxu0 0
    %232 = vmatprep.subr.bf16.mxu0 0
    %233 = vmatpush1.bf16.msra.mxu0 0
    %234 = vmatprep.subr.bf16.mxu0 0
    %235 = vmatpush1.bf16.msra.mxu0 0
    %236 = vmatprep.subr.bf16.mxu0 0
    %237 = vmatpush1.bf16.msra.mxu0 0
    %238 = vmatprep.subr.bf16.mxu0 0
    %239 = vmatpush1.bf16.msra.mxu0 0
    %240 = vmatprep.subr.bf16.mxu0 0
    %241 = vmatpush1.bf16.msra.mxu0 0
    %242 = vmatprep.subr.bf16.mxu0 0
    %243 = vmatpush1.bf16.msra.mxu0 0
    %244 = vmatprep.subr.bf16.mxu0 0
    %245 = vmatpush1.bf16.msra.mxu0 0
    %246 = vmatprep.subr.bf16.mxu0 0
    %247 = vmatpush1.bf16.msra.mxu0 0
    %248 = vmatprep.subr.bf16.mxu0 0
    %249 = vmatpush1.bf16.msra.mxu0 0
    %250 = vmatprep.subr.bf16.mxu0 0
    %251 = vmatpush1.bf16.msra.mxu0 0
    %252 = vmatprep.subr.bf16.mxu0 0
    %253 = vmatpush1.bf16.msra.mxu0 0
    %254 = vmatprep.subr.bf16.mxu0 0
    %255 = vmatpush1.bf16.msra.mxu0 0
    %256 = vmatprep.subr.bf16.mxu0 0
    %257 = vmatpush1.bf16.msra.mxu0 0
    %258 = vmatprep.mubr.bf16.mxu0 0
    %259 = vmatmul.mubr.bf16.gmra.mrb[0].mxu0 %v215
    %v260 = vpop.f32.mrb[0].mxu0
    %v261 = vadd.f32 %v156, %v260
    %v262 = vpop.f32.mrb[0].mxu0
    %v263 = vpop.f32.mrb[0].mxu0
    %v264 = vadd.f32 %v161, %v263
    %v265 = vpop.f32.mrb[0].mxu0
    %266 = vmatprep.mubr.bf16.mxu0 0
    %267 = vmatmul.mubr.bf16.gmra.mrb[0].mxu0 %v218
    %v268 = vpop.f32.mrb[0].mxu0
    %v269 = vadd.f32 %v166, %v268
    %v270 = vpop.f32.mrb[0].mxu0
    %v271 = vpop.f32.mrb[0].mxu0
    %v272 = vadd.f32 %v171, %v271
    %v273 = vpop.f32.mrb[0].mxu0
    %274 = vmatprep.mubr.bf16.mxu0 0
    %275 = vmatmul.mubr.bf16.gmra.mrb[0].mxu0 %v221
    %v276 = vpop.f32.mrb[0].mxu0
    %v277 = vadd.f32 %v176, %v276
    %v278 = vpop.f32.mrb[0].mxu0
    %v279 = vpop.f32.mrb[0].mxu0
    %v280 = vadd.f32 %v181, %v279
    %v281 = vpop.f32.mrb[0].mxu0
    %282 = vmatprep.mubr.bf16.mxu0 0
    %283 = vmatmul.mubr.bf16.gmra.mrb[0].mxu0 %v224
    %v284 = vpop.f32.mrb[0].mxu0
    %v285 = vadd.f32 %v186, %v284
    %v286 = vpop.f32.mrb[0].mxu0
    %v287 = vpop.f32.mrb[0].mxu0
    %v288 = vadd.f32 %v191, %v287
    %v289 = vpop.f32.mrb[0].mxu0
    %290 = vdwg.mxu0
    %v291 = vmax.f32 %v261, 0.0
    %v292 = vmax.f32 %v264, 0.0
    %v293 = vmax.f32 %v269, 0.0
    %v294 = vmax.f32 %v272, 0.0
    %v295 = vmax.f32 %v277, 0.0
    %v296 = vmax.f32 %v280, 0.0
    %v297 = vmax.f32 %v285, 0.0
    %v298 = vmax.f32 %v288, 0.0
    %v299 = vld [vmem:[%s5] sm:$0xf]
    %v300 = vld [vmem:[%s5 + $0x4] sm:$0xf]
    %v301 = vld [vmem:[%s5 + $0x8] sm:$0xf]
    %v302 = vld [vmem:[%s5 + $0xc] sm:$0xf]
    %v303 = vpack.c.bf16 %v292, %v291
    %v304 = vpack.c.bf16 %v294, %v293
    %v305 = vpack.c.bf16 %v296, %v295
    %v306 = vpack.c.bf16 %v298, %v297
    %v307 = vld [vmem:[%s6] sm:$0xff]
    %v308 = vld [vmem:[%s6 + $0x8] sm:$0xff]
    %v309 = vld [vmem:[%s6 + $0x10] sm:$0xff]
    %v310 = vld [vmem:[%s6 + $0x18] sm:$0xff]
    %312 = vset.pattern.permute.xlu0 0
    %313 = vperm.xlu0 %312, %v307
    %v314 = vpop.permute.xlu0 %313
    %317 = vset.pattern.permute.xlu0 0
    %318 = vperm.xlu0 %317, %v308
    %v319 = vpop.permute.xlu0 %318
    %322 = vset.pattern.permute.xlu0 0
    %323 = vperm.xlu0 %322, %v309
    %v324 = vpop.permute.xlu0 %323
    %327 = vset.pattern.permute.xlu0 0
    %328 = vperm.xlu0 %327, %v310
    %v329 = vpop.permute.xlu0 %328
    %v335 = vunpack.c.l.b16 %v299
    %v336 = vunpack.c.l.b16 %v300
    %v337 = vunpack.c.l.b16 %v301
    %v338 = vunpack.c.l.b16 %v302
    %v339 = vpack.c.b16 %v336, %v335
    %v340 = vpack.c.b16 %v338, %v337
    %vm341 = vcmask 523264
    %v343 = vsel %vm341, %v339, 0
    %v346 = vsel %vm341, %v340, 0
    %348 = vmatprep.subr.bf16.mxu0 0
    %349 = vmatpush1.bf16.msra.mxu0 %v303
    %350 = vmatprep.subr.bf16.mxu0 0
    %351 = vmatpush1.bf16.msra.mxu0 %v304
    %352 = vmatprep.subr.bf16.mxu0 0
    %353 = vmatpush1.bf16.msra.mxu0 %v305
    %354 = vmatprep.subr.bf16.mxu0 0
    %355 = vmatpush1.bf16.msra.mxu0 %v306
    %356 = vmatprep.subr.bf16.mxu0 0
    %357 = vmatpush1.bf16.msra.mxu0 0
    %358 = vmatprep.subr.bf16.mxu0 0
    %359 = vmatpush1.bf16.msra.mxu0 0
    %360 = vmatprep.subr.bf16.mxu0 0
    %361 = vmatpush1.bf16.msra.mxu0 0
    %362 = vmatprep.subr.bf16.mxu0 0
    %363 = vmatpush1.bf16.msra.mxu0 0
    %364 = vmatprep.subr.bf16.mxu0 0
    %365 = vmatpush1.bf16.msra.mxu0 0
    %366 = vmatprep.subr.bf16.mxu0 0
    %367 = vmatpush1.bf16.msra.mxu0 0
    %368 = vmatprep.subr.bf16.mxu0 0
    %369 = vmatpush1.bf16.msra.mxu0 0
    %370 = vmatprep.subr.bf16.mxu0 0
    %371 = vmatpush1.bf16.msra.mxu0 0
    %372 = vmatprep.subr.bf16.mxu0 0
    %373 = vmatpush1.bf16.msra.mxu0 0
    %374 = vmatprep.subr.bf16.mxu0 0
    %375 = vmatpush1.bf16.msra.mxu0 0
    %376 = vmatprep.subr.bf16.mxu0 0
    %377 = vmatpush1.bf16.msra.mxu0 0
    %378 = vmatprep.subr.bf16.mxu0 0
    %379 = vmatpush1.bf16.msra.mxu0 0
    %380 = vmatprep.mubr.bf16.mxu0 0
    %381 = vmatmul.mubr.bf16.gmra.mrb[0].mxu0 %v343
    %v382 = vpop.f32.mrb[0].mxu0
    %v383 = vadd.f32 %v314, %v382
    %v384 = vpop.f32.mrb[0].mxu0
    %v385 = vpop.f32.mrb[0].mxu0
    %v386 = vadd.f32 %v319, %v385
    %v387 = vpop.f32.mrb[0].mxu0
    %388 = vmatprep.mubr.bf16.mxu0 0
    %389 = vmatmul.mubr.bf16.gmra.mrb[0].mxu0 %v346
    %v390 = vpop.f32.mrb[0].mxu0
    %v391 = vadd.f32 %v324, %v390
    %v392 = vpop.f32.mrb[0].mxu0
    %v393 = vpop.f32.mrb[0].mxu0
    %v394 = vadd.f32 %v329, %v393
    %v395 = vpop.f32.mrb[0].mxu0
    %396 = vdwg.mxu0
    %v397 = vmax.f32 %v383, 0.0
    %v398 = vmax.f32 %v386, 0.0
    %v399 = vmax.f32 %v391, 0.0
    %v400 = vmax.f32 %v394, 0.0
    %v401 = vld [vmem:[%s7] sm:$0xf]
    %v402 = vpack.c.bf16 %v398, %v397
    %v403 = vpack.c.bf16 %v400, %v399
    %v404 = vld [vmem:[%s8] sm:$0xff]
    %406 = vset.pattern.permute.xlu0 0
    %407 = vperm.xlu0 %406, %v404
    %v408 = vpop.permute.xlu0 %407
    %v411 = vsel %vm213, %v401, 0
    %413 = vmatprep.subr.bf16.mxu0 0
    %414 = vmatpush1.bf16.msra.mxu0 %v402
    %415 = vmatprep.subr.bf16.mxu0 0
    %416 = vmatpush1.bf16.msra.mxu0 %v403
    %417 = vmatprep.subr.bf16.mxu0 0
    %418 = vmatpush1.bf16.msra.mxu0 0
    %419 = vmatprep.subr.bf16.mxu0 0
    %420 = vmatpush1.bf16.msra.mxu0 0
    %421 = vmatprep.subr.bf16.mxu0 0
    %422 = vmatpush1.bf16.msra.mxu0 0
    %423 = vmatprep.subr.bf16.mxu0 0
    %424 = vmatpush1.bf16.msra.mxu0 0
    %425 = vmatprep.subr.bf16.mxu0 0
    %426 = vmatpush1.bf16.msra.mxu0 0
    %427 = vmatprep.subr.bf16.mxu0 0
    %428 = vmatpush1.bf16.msra.mxu0 0
    %429 = vmatprep.subr.bf16.mxu0 0
    %430 = vmatpush1.bf16.msra.mxu0 0
    %431 = vmatprep.subr.bf16.mxu0 0
    %432 = vmatpush1.bf16.msra.mxu0 0
    %433 = vmatprep.subr.bf16.mxu0 0
    %434 = vmatpush1.bf16.msra.mxu0 0
    %435 = vmatprep.subr.bf16.mxu0 0
    %436 = vmatpush1.bf16.msra.mxu0 0
    %437 = vmatprep.subr.bf16.mxu0 0
    %438 = vmatpush1.bf16.msra.mxu0 0
    %439 = vmatprep.subr.bf16.mxu0 0
    %440 = vmatpush1.bf16.msra.mxu0 0
    %441 = vmatprep.subr.bf16.mxu0 0
    %442 = vmatpush1.bf16.msra.mxu0 0
    %443 = vmatprep.subr.bf16.mxu0 0
    %444 = vmatpush1.bf16.msra.mxu0 0
    %445 = vmatprep.mubr.bf16.mxu0 0
    %446 = vmatmul.mubr.bf16.gmra.mrb[0].mxu0 %v411
    %v447 = vpop.f32.mrb[0].mxu0
    %v448 = vadd.f32 %v408, %v447
    %v449 = vpop.f32.mrb[0].mxu0
    %v450 = vpop.f32.mrb[0].mxu0
    %v451 = vpop.f32.mrb[0].mxu0
    %452 = vdwg.mxu0
    %vm453 = vcmask 64512
    %454 = vst.msk [vmem:[#allocation2] sm:$0xff] %vm453, %v448
    // Predicated region
    $region38: #{tpu_custom_call.1} parent=1 // pred_check
      _
    $region39: #{tpu_custom_call.1} parent=1 // pred_check_branch
      %456 = sbr.rel (0) target = $region41
    $region40: #{tpu_custom_call.1} parent=1 // pred_region
      %s458 = ssub.s32 128, 128
      %459 = vsyncadd [#allocation3], %s458
      %s461 = sshll.u32 [#allocation2], 4
      %s462 = int_to_ptr.vmem [resolvable:$true] %s461
      %464 = dma.vmem_to_hbm [thread:$0]  %s462, 128, %s9, [#allocation3]
    $region41: #{tpu_custom_call.1} parent=1 // pred_fallthru
      _
    // Predicated region
    $region42: #{tpu_custom_call.1} parent=1 // pred_check
      _
    $region43: #{tpu_custom_call.1} parent=1 // pred_check_branch
      %466 = sbr.rel (0) target = $region45
    $region44: #{tpu_custom_call.1} parent=1 // pred_region
      %467 = dma.done [#allocation3], 128
    $region45: #{tpu_custom_call.1} parent=1 // pred_fallthru
      _
    %468 = vsyncpa [#allocation3], 1

</llo_original>
